<compile_context>
chip_gen: v5e
topology: v5e:2x2
jax: 0.10.0
libtpu: 0.0.40
codegen_flags: <defaults>
</compile_context>

<pallas_src>
import functools

import jax
import jax.numpy as jnp
from jax import lax
from jax.experimental import pallas as pl
from jax.experimental.pallas import tpu as pltpu


def _cross_attn_kernel(x_ref, y_ref, wq_ref, wkv_ref, wp_ref, bp_ref, o_ref,
                       *, num_heads, scale):
    # x_ref : (bt, Nq, C)   query tokens for this batch block
    # y_ref : (bt, Nk, C)   key/value tokens for this batch block
    # wq_ref: (C, C)        full Wq (resident)
    # wkv_ref: (C, 2C)      full Wkv (resident)
    # wp_ref: (C, C)        full Wproj (resident)
    # bp_ref: (1, C)        proj bias
    # o_ref : (bt, Nq, C)   output block
    bt, n_q, c = x_ref.shape
    _, n_k, _ = y_ref.shape
    d = c // num_heads

    wq = wq_ref[...]
    wkv = wkv_ref[...]
    wp = wp_ref[...]
    bp = bp_ref[...]

    # Static unroll over the (small) batch block and heads; all matmuls are
    # plain 2-D MXU ops with f32 accumulation.
    for b in range(bt):
        x = x_ref[b]                                                    # (Nq, C)
        y = y_ref[b]                                                    # (Nk, C)

        # Full-width projections (K = C), scale folded into q.
        q = jnp.dot(x, wq, preferred_element_type=jnp.float32) * scale  # (Nq, C)
        kv = jnp.dot(y, wkv, preferred_element_type=jnp.float32)        # (Nk, 2C)
        k = kv[:, :c]
        v = kv[:, c:]

        ctx_parts = []
        for h in range(num_heads):
            sl = slice(h * d, (h + 1) * d)
            qh = q[:, sl]                                                # (Nq, d)
            kh = k[:, sl]                                                # (Nk, d)
            vh = v[:, sl]                                                # (Nk, d)

            # NT matmul (no explicit transpose op).
            s = lax.dot_general(qh, kh, (((1,), (1,)), ((), ())),
                                preferred_element_type=jnp.float32)     # (Nq, Nk)

            # Numerically stable softmax with deferred normalization
            # (attn_drop p=0.0 -> identity).
            s = s - jnp.max(s, axis=-1, keepdims=True)
            p = jnp.exp(s)
            denom = jnp.sum(p, axis=-1, keepdims=True)                   # (Nq, 1)
            ctx_h = jnp.dot(p, vh, preferred_element_type=jnp.float32)   # (Nq, d)
            ctx_parts.append(ctx_h * pl.reciprocal(denom))               # exact 1/x

        ctx = jnp.concatenate(ctx_parts, axis=-1)                        # (Nq, C)

        # Single output projection + bias (proj_drop p=0.0 -> identity).
        out = jnp.dot(ctx, wp, preferred_element_type=jnp.float32) + bp
        o_ref[b] = out.astype(o_ref.dtype)


def cross_attention_pallas(x, y, wq, wkv, wproj, bproj, *, num_heads,
                           batch_tile=None):
    """x: (B, Nq, C); y: (B, Nk, C).

    Weights are stored pre-transposed as (in, out):
      wq (C, C), wkv (C, 2C), wproj (C, C), bproj (C,).
    (torch nn.Linear weight is (out, in); pass weight.T here.)
    """
    B, Nq, C = x.shape
    By, Nk, Cy = y.shape
    assert B == By and C == Cy
    assert C % num_heads == 0
    d = C // num_heads
    scale = d ** (-0.5)

    if batch_tile is None:
        # Rough per-batch f32 working set (x/y/out blocks + q/kv/scores/ctx),
        # kept well under the default scoped VMEM limit so no vmem_limit_bytes
        # override is needed at these sizes.
        per_b = 4 * (3 * Nq * C + 3 * Nk * C + Nq * Nk)
        budget = 4 << 20
        batch_tile = max(1, min(B, budget // max(per_b, 1)))
        while B % batch_tile:
            batch_tile -= 1

    grid = (B // batch_tile,)
    bp2d = bproj.reshape(1, C)

    kernel = functools.partial(_cross_attn_kernel,
                               num_heads=num_heads, scale=scale)

    return pl.pallas_call(
        kernel,
        out_shape=jax.ShapeDtypeStruct((B, Nq, C), x.dtype),
        grid_spec=pltpu.PrefetchScalarGridSpec(
            num_scalar_prefetch=0,
            grid=grid,
            in_specs=[
                pl.BlockSpec((batch_tile, Nq, C), lambda i: (i, 0, 0)),  # x
                pl.BlockSpec((batch_tile, Nk, C), lambda i: (i, 0, 0)),  # y
                pl.BlockSpec((C, C), lambda i: (0, 0)),                  # Wq (resident)
                pl.BlockSpec((C, 2 * C), lambda i: (0, 0)),              # Wkv (resident)
                pl.BlockSpec((C, C), lambda i: (0, 0)),                  # Wproj (resident)
                pl.BlockSpec((1, C), lambda i: (0, 0)),                  # bias
            ],
            out_specs=pl.BlockSpec((batch_tile, Nq, C), lambda i: (i, 0, 0)),
        ),
        compiler_params=pltpu.CompilerParams(
            dimension_semantics=("parallel",),
        ),
    )(x, y, wq, wkv, wproj, bp2d)


def cross_attention_reference(x, y, wq, wkv, wproj, bproj, *, num_heads):
    """Pure-JAX reference matching torch CrossAttention.forward (drop=0.0)."""
    B, Nq, C = x.shape
    _, Nk, _ = y.shape
    d = C // num_heads
    scale = d ** (-0.5)

    q = jnp.einsum("bnc,co->bno", x, wq)
    q = q.reshape(B, Nq, num_heads, d).transpose(0, 2, 1, 3)             # (B,H,Nq,d)
    kv = jnp.einsum("bnc,co->bno", y, wkv)
    kv = kv.reshape(B, Nk, 2, num_heads, d).transpose(2, 0, 3, 1, 4)     # (2,B,H,Nk,d)
    k, v = kv[0], kv[1]

    attn = jnp.einsum("bhqd,bhkd->bhqk", q, k) * scale
    attn = jax.nn.softmax(attn, axis=-1)
    ctx = jnp.einsum("bhqk,bhkd->bhqd", attn, v)
    ctx = ctx.transpose(0, 2, 1, 3).reshape(B, Nq, C)
    return jnp.einsum("bnc,co->bno", ctx, wproj) + bproj


if __name__ == "__main__":
    # Small shapes consistent with the module: batch=2, queries=8, keys=16,
    # dim=32, heads=4 (head_dim=8).
    B, Nq, Nk, C, H = 2, 8, 16, 32, 4

    key = jax.random.PRNGKey(0)
    kx, ky, k1, k2, k3, k4 = jax.random.split(key, 6)

    x = jax.random.normal(kx, (B, Nq, C), dtype=jnp.float32)
    y = jax.random.normal(ky, (B, Nk, C), dtype=jnp.float32)

    # Deterministic synthetic parameters, stored (in, out).
    wq = jax.random.normal(k1, (C, C), dtype=jnp.float32) * 0.1
    wkv = jax.random.normal(k2, (C, 2 * C), dtype=jnp.float32) * 0.1
    wproj = jax.random.normal(k3, (C, C), dtype=jnp.float32) * 0.1
    bproj = jax.random.normal(k4, (C,), dtype=jnp.float32) * 0.1

    out = cross_attention_pallas(x, y, wq, wkv, wproj, bproj, num_heads=H)
    out = jax.block_until_ready(out)

    ref = cross_attention_reference(x, y, wq, wkv, wproj, bproj, num_heads=H)
    assert out.shape == (B, Nq, C)
    assert jnp.allclose(out, ref, atol=1e-4, rtol=1e-4), "mismatch vs reference"

    print("KERNEL_OK")
</pallas_src>

<mosaic_0001>
module attributes {stable_mosaic.version = 11 : i64} {
  func.func @_cross_attn_kernel(%arg0: i32, %arg1: memref<2x8x32xf32, #tpu.memory_space<vmem>>, %arg2: memref<2x16x32xf32, #tpu.memory_space<vmem>>, %arg3: memref<32x32xf32, #tpu.memory_space<vmem>>, %arg4: memref<32x64xf32, #tpu.memory_space<vmem>>, %arg5: memref<32x32xf32, #tpu.memory_space<vmem>>, %arg6: memref<1x32xf32, #tpu.memory_space<vmem>>, %arg7: memref<2x8x32xf32, #tpu.memory_space<vmem>>) attributes {dimension_semantics = [#tpu.dimension_semantics<parallel>], iteration_bounds = array<i64: 1>, scalar_prefetch = 0 : i64, scratch_operands = 0 : i64, tpu.core_type = #tpu.core_type<tc>, window_params = [{transform_indices = @transform_0, window_bounds = array<i64: 2, 8, 32>}, {transform_indices = @transform_1, window_bounds = array<i64: 2, 16, 32>}, {pipeline_mode = #tpu.pipeline_mode<synchronous>, transform_indices = @transform_2, window_bounds = array<i64: 32, 32>}, {pipeline_mode = #tpu.pipeline_mode<synchronous>, transform_indices = @transform_3, window_bounds = array<i64: 32, 64>}, {pipeline_mode = #tpu.pipeline_mode<synchronous>, transform_indices = @transform_4, window_bounds = array<i64: 32, 32>}, {pipeline_mode = #tpu.pipeline_mode<synchronous>, transform_indices = @transform_5, window_bounds = array<i64: 1, 32>}, {transform_indices = @transform_6, window_bounds = array<i64: 2, 8, 32>}]} {
    %c0 = arith.constant 0 : index
    %c0_0 = arith.constant 0 : index
    %0 = vector.load %arg3[%c0, %c0_0] : memref<32x32xf32, #tpu.memory_space<vmem>>, vector<32x32xf32>
    %c0_1 = arith.constant 0 : index
    %c0_2 = arith.constant 0 : index
    %1 = vector.load %arg4[%c0_1, %c0_2] : memref<32x64xf32, #tpu.memory_space<vmem>>, vector<32x64xf32>
    %c0_3 = arith.constant 0 : index
    %c0_4 = arith.constant 0 : index
    %2 = vector.load %arg5[%c0_3, %c0_4] : memref<32x32xf32, #tpu.memory_space<vmem>>, vector<32x32xf32>
    %c0_5 = arith.constant 0 : index
    %c0_6 = arith.constant 0 : index
    %3 = vector.load %arg6[%c0_5, %c0_6] : memref<1x32xf32, #tpu.memory_space<vmem>>, vector<1x32xf32>
    %c0_7 = arith.constant 0 : index
    %c0_8 = arith.constant 0 : index
    %c0_9 = arith.constant 0 : index
    %4 = vector.load %arg1[%c0_7, %c0_8, %c0_9] : memref<2x8x32xf32, #tpu.memory_space<vmem>>, vector<1x8x32xf32>
    %5 = vector.shape_cast %4 : vector<1x8x32xf32> to vector<8x32xf32>
    %c0_10 = arith.constant 0 : index
    %c0_11 = arith.constant 0 : index
    %c0_12 = arith.constant 0 : index
    %6 = vector.load %arg2[%c0_10, %c0_11, %c0_12] : memref<2x16x32xf32, #tpu.memory_space<vmem>>, vector<1x16x32xf32>
    %7 = vector.shape_cast %6 : vector<1x16x32xf32> to vector<16x32xf32>
    %cst = arith.constant dense<0.000000e+00> : vector<8x32xf32>
    %8 = tpu.matmul %5, %0, %cst {dimension_numbers = #tpu.dot_dimension_numbers<[1], [0], [0], [1], [0, 0, 1, 1], [], []>} : vector<8x32xf32>, vector<32x32xf32>, vector<8x32xf32> -> vector<8x32xf32>
    %cst_13 = arith.constant 0.353553385 : f32
    %9 = vector.broadcast %cst_13 : f32 to vector<8x32xf32>
    %10 = arith.mulf %8, %9 : vector<8x32xf32>
    %cst_14 = arith.constant dense<0.000000e+00> : vector<16x64xf32>
    %11 = tpu.matmul %7, %1, %cst_14 {dimension_numbers = #tpu.dot_dimension_numbers<[1], [0], [0], [1], [0, 0, 1, 1], [], []>} : vector<16x32xf32>, vector<32x64xf32>, vector<16x64xf32> -> vector<16x64xf32>
    %12 = vector.extract_strided_slice %11 {offsets = [0, 0], sizes = [16, 32], strides = [1, 1]} : vector<16x64xf32> to vector<16x32xf32>
    %13 = vector.extract_strided_slice %11 {offsets = [0, 32], sizes = [16, 32], strides = [1, 1]} : vector<16x64xf32> to vector<16x32xf32>
    %14 = vector.extract_strided_slice %10 {offsets = [0, 0], sizes = [8, 8], strides = [1, 1]} : vector<8x32xf32> to vector<8x8xf32>
    %15 = vector.extract_strided_slice %12 {offsets = [0, 0], sizes = [16, 8], strides = [1, 1]} : vector<16x32xf32> to vector<16x8xf32>
    %16 = vector.extract_strided_slice %13 {offsets = [0, 0], sizes = [16, 8], strides = [1, 1]} : vector<16x32xf32> to vector<16x8xf32>
    %cst_15 = arith.constant dense<0.000000e+00> : vector<8x16xf32>
    %17 = tpu.matmul %14, %15, %cst_15 {dimension_numbers = #tpu.dot_dimension_numbers<[1], [1], [0], [0], [0, 0, 1, 0], [], []>} : vector<8x8xf32>, vector<16x8xf32>, vector<8x16xf32> -> vector<8x16xf32>
    %cst_16 = arith.constant dense<0xFF800000> : vector<8xf32>
    %18 = vector.multi_reduction <maximumf>, %17, %cst_16 [1] : vector<8x16xf32> to vector<8xf32>
    %19 = vector.shape_cast %18 : vector<8xf32> to vector<8x1xf32>
    %20 = vector.broadcast %19 : vector<8x1xf32> to vector<8x16xf32>
    %21 = arith.subf %17, %20 : vector<8x16xf32>
    %22 = math.exp %21 : vector<8x16xf32>
    %cst_17 = arith.constant dense<0.000000e+00> : vector<8xf32>
    %23 = vector.multi_reduction <add>, %22, %cst_17 [1] : vector<8x16xf32> to vector<8xf32>
    %24 = vector.shape_cast %23 : vector<8xf32> to vector<8x1xf32>
    %cst_18 = arith.constant dense<0.000000e+00> : vector<8x8xf32>
    %25 = tpu.matmul %22, %16, %cst_18 {dimension_numbers = #tpu.dot_dimension_numbers<[1], [0], [0], [1], [0, 0, 1, 1], [], []>} : vector<8x16xf32>, vector<16x8xf32>, vector<8x8xf32> -> vector<8x8xf32>
    %26 = tpu.reciprocal %24 : vector<8x1xf32> -> vector<8x1xf32>
    %27 = vector.broadcast %26 : vector<8x1xf32> to vector<8x8xf32>
    %28 = arith.mulf %25, %27 : vector<8x8xf32>
    %29 = vector.extract_strided_slice %10 {offsets = [0, 8], sizes = [8, 8], strides = [1, 1]} : vector<8x32xf32> to vector<8x8xf32>
    %30 = vector.extract_strided_slice %12 {offsets = [0, 8], sizes = [16, 8], strides = [1, 1]} : vector<16x32xf32> to vector<16x8xf32>
    %31 = vector.extract_strided_slice %13 {offsets = [0, 8], sizes = [16, 8], strides = [1, 1]} : vector<16x32xf32> to vector<16x8xf32>
    %cst_19 = arith.constant dense<0.000000e+00> : vector<8x16xf32>
    %32 = tpu.matmul %29, %30, %cst_19 {dimension_numbers = #tpu.dot_dimension_numbers<[1], [1], [0], [0], [0, 0, 1, 0], [], []>} : vector<8x8xf32>, vector<16x8xf32>, vector<8x16xf32> -> vector<8x16xf32>
    %cst_20 = arith.constant dense<0xFF800000> : vector<8xf32>
    %33 = vector.multi_reduction <maximumf>, %32, %cst_20 [1] : vector<8x16xf32> to vector<8xf32>
    %34 = vector.shape_cast %33 : vector<8xf32> to vector<8x1xf32>
    %35 = vector.broadcast %34 : vector<8x1xf32> to vector<8x16xf32>
    %36 = arith.subf %32, %35 : vector<8x16xf32>
    %37 = math.exp %36 : vector<8x16xf32>
    %cst_21 = arith.constant dense<0.000000e+00> : vector<8xf32>
    %38 = vector.multi_reduction <add>, %37, %cst_21 [1] : vector<8x16xf32> to vector<8xf32>
    %39 = vector.shape_cast %38 : vector<8xf32> to vector<8x1xf32>
    %cst_22 = arith.constant dense<0.000000e+00> : vector<8x8xf32>
    %40 = tpu.matmul %37, %31, %cst_22 {dimension_numbers = #tpu.dot_dimension_numbers<[1], [0], [0], [1], [0, 0, 1, 1], [], []>} : vector<8x16xf32>, vector<16x8xf32>, vector<8x8xf32> -> vector<8x8xf32>
    %41 = tpu.reciprocal %39 : vector<8x1xf32> -> vector<8x1xf32>
    %42 = vector.broadcast %41 : vector<8x1xf32> to vector<8x8xf32>
    %43 = arith.mulf %40, %42 : vector<8x8xf32>
    %44 = vector.extract_strided_slice %10 {offsets = [0, 16], sizes = [8, 8], strides = [1, 1]} : vector<8x32xf32> to vector<8x8xf32>
    %45 = vector.extract_strided_slice %12 {offsets = [0, 16], sizes = [16, 8], strides = [1, 1]} : vector<16x32xf32> to vector<16x8xf32>
    %46 = vector.extract_strided_slice %13 {offsets = [0, 16], sizes = [16, 8], strides = [1, 1]} : vector<16x32xf32> to vector<16x8xf32>
    %cst_23 = arith.constant dense<0.000000e+00> : vector<8x16xf32>
    %47 = tpu.matmul %44, %45, %cst_23 {dimension_numbers = #tpu.dot_dimension_numbers<[1], [1], [0], [0], [0, 0, 1, 0], [], []>} : vector<8x8xf32>, vector<16x8xf32>, vector<8x16xf32> -> vector<8x16xf32>
    %cst_24 = arith.constant dense<0xFF800000> : vector<8xf32>
    %48 = vector.multi_reduction <maximumf>, %47, %cst_24 [1] : vector<8x16xf32> to vector<8xf32>
    %49 = vector.shape_cast %48 : vector<8xf32> to vector<8x1xf32>
    %50 = vector.broadcast %49 : vector<8x1xf32> to vector<8x16xf32>
    %51 = arith.subf %47, %50 : vector<8x16xf32>
    %52 = math.exp %51 : vector<8x16xf32>
    %cst_25 = arith.constant dense<0.000000e+00> : vector<8xf32>
    %53 = vector.multi_reduction <add>, %52, %cst_25 [1] : vector<8x16xf32> to vector<8xf32>
    %54 = vector.shape_cast %53 : vector<8xf32> to vector<8x1xf32>
    %cst_26 = arith.constant dense<0.000000e+00> : vector<8x8xf32>
    %55 = tpu.matmul %52, %46, %cst_26 {dimension_numbers = #tpu.dot_dimension_numbers<[1], [0], [0], [1], [0, 0, 1, 1], [], []>} : vector<8x16xf32>, vector<16x8xf32>, vector<8x8xf32> -> vector<8x8xf32>
    %56 = tpu.reciprocal %54 : vector<8x1xf32> -> vector<8x1xf32>
    %57 = vector.broadcast %56 : vector<8x1xf32> to vector<8x8xf32>
    %58 = arith.mulf %55, %57 : vector<8x8xf32>
    %59 = vector.extract_strided_slice %10 {offsets = [0, 24], sizes = [8, 8], strides = [1, 1]} : vector<8x32xf32> to vector<8x8xf32>
    %60 = vector.extract_strided_slice %12 {offsets = [0, 24], sizes = [16, 8], strides = [1, 1]} : vector<16x32xf32> to vector<16x8xf32>
    %61 = vector.extract_strided_slice %13 {offsets = [0, 24], sizes = [16, 8], strides = [1, 1]} : vector<16x32xf32> to vector<16x8xf32>
    %cst_27 = arith.constant dense<0.000000e+00> : vector<8x16xf32>
    %62 = tpu.matmul %59, %60, %cst_27 {dimension_numbers = #tpu.dot_dimension_numbers<[1], [1], [0], [0], [0, 0, 1, 0], [], []>} : vector<8x8xf32>, vector<16x8xf32>, vector<8x16xf32> -> vector<8x16xf32>
    %cst_28 = arith.constant dense<0xFF800000> : vector<8xf32>
    %63 = vector.multi_reduction <maximumf>, %62, %cst_28 [1] : vector<8x16xf32> to vector<8xf32>
    %64 = vector.shape_cast %63 : vector<8xf32> to vector<8x1xf32>
    %65 = vector.broadcast %64 : vector<8x1xf32> to vector<8x16xf32>
    %66 = arith.subf %62, %65 : vector<8x16xf32>
    %67 = math.exp %66 : vector<8x16xf32>
    %cst_29 = arith.constant dense<0.000000e+00> : vector<8xf32>
    %68 = vector.multi_reduction <add>, %67, %cst_29 [1] : vector<8x16xf32> to vector<8xf32>
    %69 = vector.shape_cast %68 : vector<8xf32> to vector<8x1xf32>
    %cst_30 = arith.constant dense<0.000000e+00> : vector<8x8xf32>
    %70 = tpu.matmul %67, %61, %cst_30 {dimension_numbers = #tpu.dot_dimension_numbers<[1], [0], [0], [1], [0, 0, 1, 1], [], []>} : vector<8x16xf32>, vector<16x8xf32>, vector<8x8xf32> -> vector<8x8xf32>
    %71 = tpu.reciprocal %69 : vector<8x1xf32> -> vector<8x1xf32>
    %72 = vector.broadcast %71 : vector<8x1xf32> to vector<8x8xf32>
    %73 = arith.mulf %70, %72 : vector<8x8xf32>
    %74 = tpu.concatenate %28, %43, %58, %73 in 1 : vector<8x8xf32>, vector<8x8xf32>, vector<8x8xf32>, vector<8x8xf32> -> vector<8x32xf32>
    %cst_31 = arith.constant dense<0.000000e+00> : vector<8x32xf32>
    %75 = tpu.matmul %74, %2, %cst_31 {dimension_numbers = #tpu.dot_dimension_numbers<[1], [0], [0], [1], [0, 0, 1, 1], [], []>} : vector<8x32xf32>, vector<32x32xf32>, vector<8x32xf32> -> vector<8x32xf32>
    %76 = vector.broadcast %3 : vector<1x32xf32> to vector<8x32xf32>
    %77 = arith.addf %75, %76 : vector<8x32xf32>
    %c0_32 = arith.constant 0 : index
    %c0_33 = arith.constant 0 : index
    %c0_34 = arith.constant 0 : index
    %78 = vector.load %arg7[%c0_32, %c0_33, %c0_34] : memref<2x8x32xf32, #tpu.memory_space<vmem>>, vector<1x8x32xf32>
    %79 = vector.shape_cast %78 : vector<1x8x32xf32> to vector<8x32xf32>
    %80 = vector.shape_cast %77 : vector<8x32xf32> to vector<1x8x32xf32>
    tpu.vector_store %arg7[%c0_32, %c0_33, %c0_34], %80 {strides = array<i32>} : memref<2x8x32xf32, #tpu.memory_space<vmem>>, vector<1x8x32xf32>,
    %c1 = arith.constant 1 : index
    %c0_35 = arith.constant 0 : index
    %c0_36 = arith.constant 0 : index
    %81 = vector.load %arg1[%c1, %c0_35, %c0_36] : memref<2x8x32xf32, #tpu.memory_space<vmem>>, vector<1x8x32xf32>
    %82 = vector.shape_cast %81 : vector<1x8x32xf32> to vector<8x32xf32>
    %c1_37 = arith.constant 1 : index
    %c0_38 = arith.constant 0 : index
    %c0_39 = arith.constant 0 : index
    %83 = vector.load %arg2[%c1_37, %c0_38, %c0_39] : memref<2x16x32xf32, #tpu.memory_space<vmem>>, vector<1x16x32xf32>
    %84 = vector.shape_cast %83 : vector<1x16x32xf32> to vector<16x32xf32>
    %cst_40 = arith.constant dense<0.000000e+00> : vector<8x32xf32>
    %85 = tpu.matmul %82, %0, %cst_40 {dimension_numbers = #tpu.dot_dimension_numbers<[1], [0], [0], [1], [0, 0, 1, 1], [], []>} : vector<8x32xf32>, vector<32x32xf32>, vector<8x32xf32> -> vector<8x32xf32>
    %cst_41 = arith.constant 0.353553385 : f32
    %86 = vector.broadcast %cst_41 : f32 to vector<8x32xf32>
    %87 = arith.mulf %85, %86 : vector<8x32xf32>
    %cst_42 = arith.constant dense<0.000000e+00> : vector<16x64xf32>
    %88 = tpu.matmul %84, %1, %cst_42 {dimension_numbers = #tpu.dot_dimension_numbers<[1], [0], [0], [1], [0, 0, 1, 1], [], []>} : vector<16x32xf32>, vector<32x64xf32>, vector<16x64xf32> -> vector<16x64xf32>
    %89 = vector.extract_strided_slice %88 {offsets = [0, 0], sizes = [16, 32], strides = [1, 1]} : vector<16x64xf32> to vector<16x32xf32>
    %90 = vector.extract_strided_slice %88 {offsets = [0, 32], sizes = [16, 32], strides = [1, 1]} : vector<16x64xf32> to vector<16x32xf32>
    %91 = vector.extract_strided_slice %87 {offsets = [0, 0], sizes = [8, 8], strides = [1, 1]} : vector<8x32xf32> to vector<8x8xf32>
    %92 = vector.extract_strided_slice %89 {offsets = [0, 0], sizes = [16, 8], strides = [1, 1]} : vector<16x32xf32> to vector<16x8xf32>
    %93 = vector.extract_strided_slice %90 {offsets = [0, 0], sizes = [16, 8], strides = [1, 1]} : vector<16x32xf32> to vector<16x8xf32>
    %cst_43 = arith.constant dense<0.000000e+00> : vector<8x16xf32>
    %94 = tpu.matmul %91, %92, %cst_43 {dimension_numbers = #tpu.dot_dimension_numbers<[1], [1], [0], [0], [0, 0, 1, 0], [], []>} : vector<8x8xf32>, vector<16x8xf32>, vector<8x16xf32> -> vector<8x16xf32>
    %cst_44 = arith.constant dense<0xFF800000> : vector<8xf32>
    %95 = vector.multi_reduction <maximumf>, %94, %cst_44 [1] : vector<8x16xf32> to vector<8xf32>
    %96 = vector.shape_cast %95 : vector<8xf32> to vector<8x1xf32>
    %97 = vector.broadcast %96 : vector<8x1xf32> to vector<8x16xf32>
    %98 = arith.subf %94, %97 : vector<8x16xf32>
    %99 = math.exp %98 : vector<8x16xf32>
    %cst_45 = arith.constant dense<0.000000e+00> : vector<8xf32>
    %100 = vector.multi_reduction <add>, %99, %cst_45 [1] : vector<8x16xf32> to vector<8xf32>
    %101 = vector.shape_cast %100 : vector<8xf32> to vector<8x1xf32>
    %cst_46 = arith.constant dense<0.000000e+00> : vector<8x8xf32>
    %102 = tpu.matmul %99, %93, %cst_46 {dimension_numbers = #tpu.dot_dimension_numbers<[1], [0], [0], [1], [0, 0, 1, 1], [], []>} : vector<8x16xf32>, vector<16x8xf32>, vector<8x8xf32> -> vector<8x8xf32>
    %103 = tpu.reciprocal %101 : vector<8x1xf32> -> vector<8x1xf32>
    %104 = vector.broadcast %103 : vector<8x1xf32> to vector<8x8xf32>
    %105 = arith.mulf %102, %104 : vector<8x8xf32>
    %106 = vector.extract_strided_slice %87 {offsets = [0, 8], sizes = [8, 8], strides = [1, 1]} : vector<8x32xf32> to vector<8x8xf32>
    %107 = vector.extract_strided_slice %89 {offsets = [0, 8], sizes = [16, 8], strides = [1, 1]} : vector<16x32xf32> to vector<16x8xf32>
    %108 = vector.extract_strided_slice %90 {offsets = [0, 8], sizes = [16, 8], strides = [1, 1]} : vector<16x32xf32> to vector<16x8xf32>
    %cst_47 = arith.constant dense<0.000000e+00> : vector<8x16xf32>
    %109 = tpu.matmul %106, %107, %cst_47 {dimension_numbers = #tpu.dot_dimension_numbers<[1], [1], [0], [0], [0, 0, 1, 0], [], []>} : vector<8x8xf32>, vector<16x8xf32>, vector<8x16xf32> -> vector<8x16xf32>
    %cst_48 = arith.constant dense<0xFF800000> : vector<8xf32>
    %110 = vector.multi_reduction <maximumf>, %109, %cst_48 [1] : vector<8x16xf32> to vector<8xf32>
    %111 = vector.shape_cast %110 : vector<8xf32> to vector<8x1xf32>
    %112 = vector.broadcast %111 : vector<8x1xf32> to vector<8x16xf32>
    %113 = arith.subf %109, %112 : vector<8x16xf32>
    %114 = math.exp %113 : vector<8x16xf32>
    %cst_49 = arith.constant dense<0.000000e+00> : vector<8xf32>
    %115 = vector.multi_reduction <add>, %114, %cst_49 [1] : vector<8x16xf32> to vector<8xf32>
    %116 = vector.shape_cast %115 : vector<8xf32> to vector<8x1xf32>
    %cst_50 = arith.constant dense<0.000000e+00> : vector<8x8xf32>
    %117 = tpu.matmul %114, %108, %cst_50 {dimension_numbers = #tpu.dot_dimension_numbers<[1], [0], [0], [1], [0, 0, 1, 1], [], []>} : vector<8x16xf32>, vector<16x8xf32>, vector<8x8xf32> -> vector<8x8xf32>
    %118 = tpu.reciprocal %116 : vector<8x1xf32> -> vector<8x1xf32>
    %119 = vector.broadcast %118 : vector<8x1xf32> to vector<8x8xf32>
    %120 = arith.mulf %117, %119 : vector<8x8xf32>
    %121 = vector.extract_strided_slice %87 {offsets = [0, 16], sizes = [8, 8], strides = [1, 1]} : vector<8x32xf32> to vector<8x8xf32>
    %122 = vector.extract_strided_slice %89 {offsets = [0, 16], sizes = [16, 8], strides = [1, 1]} : vector<16x32xf32> to vector<16x8xf32>
    %123 = vector.extract_strided_slice %90 {offsets = [0, 16], sizes = [16, 8], strides = [1, 1]} : vector<16x32xf32> to vector<16x8xf32>
    %cst_51 = arith.constant dense<0.000000e+00> : vector<8x16xf32>
    %124 = tpu.matmul %121, %122, %cst_51 {dimension_numbers = #tpu.dot_dimension_numbers<[1], [1], [0], [0], [0, 0, 1, 0], [], []>} : vector<8x8xf32>, vector<16x8xf32>, vector<8x16xf32> -> vector<8x16xf32>
    %cst_52 = arith.constant dense<0xFF800000> : vector<8xf32>
    %125 = vector.multi_reduction <maximumf>, %124, %cst_52 [1] : vector<8x16xf32> to vector<8xf32>
    %126 = vector.shape_cast %125 : vector<8xf32> to vector<8x1xf32>
    %127 = vector.broadcast %126 : vector<8x1xf32> to vector<8x16xf32>
    %128 = arith.subf %124, %127 : vector<8x16xf32>
    %129 = math.exp %128 : vector<8x16xf32>
    %cst_53 = arith.constant dense<0.000000e+00> : vector<8xf32>
    %130 = vector.multi_reduction <add>, %129, %cst_53 [1] : vector<8x16xf32> to vector<8xf32>
    %131 = vector.shape_cast %130 : vector<8xf32> to vector<8x1xf32>
    %cst_54 = arith.constant dense<0.000000e+00> : vector<8x8xf32>
    %132 = tpu.matmul %129, %123, %cst_54 {dimension_numbers = #tpu.dot_dimension_numbers<[1], [0], [0], [1], [0, 0, 1, 1], [], []>} : vector<8x16xf32>, vector<16x8xf32>, vector<8x8xf32> -> vector<8x8xf32>
    %133 = tpu.reciprocal %131 : vector<8x1xf32> -> vector<8x1xf32>
    %134 = vector.broadcast %133 : vector<8x1xf32> to vector<8x8xf32>
    %135 = arith.mulf %132, %134 : vector<8x8xf32>
    %136 = vector.extract_strided_slice %87 {offsets = [0, 24], sizes = [8, 8], strides = [1, 1]} : vector<8x32xf32> to vector<8x8xf32>
    %137 = vector.extract_strided_slice %89 {offsets = [0, 24], sizes = [16, 8], strides = [1, 1]} : vector<16x32xf32> to vector<16x8xf32>
    %138 = vector.extract_strided_slice %90 {offsets = [0, 24], sizes = [16, 8], strides = [1, 1]} : vector<16x32xf32> to vector<16x8xf32>
    %cst_55 = arith.constant dense<0.000000e+00> : vector<8x16xf32>
    %139 = tpu.matmul %136, %137, %cst_55 {dimension_numbers = #tpu.dot_dimension_numbers<[1], [1], [0], [0], [0, 0, 1, 0], [], []>} : vector<8x8xf32>, vector<16x8xf32>, vector<8x16xf32> -> vector<8x16xf32>
    %cst_56 = arith.constant dense<0xFF800000> : vector<8xf32>
    %140 = vector.multi_reduction <maximumf>, %139, %cst_56 [1] : vector<8x16xf32> to vector<8xf32>
    %141 = vector.shape_cast %140 : vector<8xf32> to vector<8x1xf32>
    %142 = vector.broadcast %141 : vector<8x1xf32> to vector<8x16xf32>
    %143 = arith.subf %139, %142 : vector<8x16xf32>
    %144 = math.exp %143 : vector<8x16xf32>
    %cst_57 = arith.constant dense<0.000000e+00> : vector<8xf32>
    %145 = vector.multi_reduction <add>, %144, %cst_57 [1] : vector<8x16xf32> to vector<8xf32>
    %146 = vector.shape_cast %145 : vector<8xf32> to vector<8x1xf32>
    %cst_58 = arith.constant dense<0.000000e+00> : vector<8x8xf32>
    %147 = tpu.matmul %144, %138, %cst_58 {dimension_numbers = #tpu.dot_dimension_numbers<[1], [0], [0], [1], [0, 0, 1, 1], [], []>} : vector<8x16xf32>, vector<16x8xf32>, vector<8x8xf32> -> vector<8x8xf32>
    %148 = tpu.reciprocal %146 : vector<8x1xf32> -> vector<8x1xf32>
    %149 = vector.broadcast %148 : vector<8x1xf32> to vector<8x8xf32>
    %150 = arith.mulf %147, %149 : vector<8x8xf32>
    %151 = tpu.concatenate %105, %120, %135, %150 in 1 : vector<8x8xf32>, vector<8x8xf32>, vector<8x8xf32>, vector<8x8xf32> -> vector<8x32xf32>
    %cst_59 = arith.constant dense<0.000000e+00> : vector<8x32xf32>
    %152 = tpu.matmul %151, %2, %cst_59 {dimension_numbers = #tpu.dot_dimension_numbers<[1], [0], [0], [1], [0, 0, 1, 1], [], []>} : vector<8x32xf32>, vector<32x32xf32>, vector<8x32xf32> -> vector<8x32xf32>
    %153 = vector.broadcast %3 : vector<1x32xf32> to vector<8x32xf32>
    %154 = arith.addf %152, %153 : vector<8x32xf32>
    %c1_60 = arith.constant 1 : index
    %c0_61 = arith.constant 0 : index
    %c0_62 = arith.constant 0 : index
    %155 = vector.load %arg7[%c1_60, %c0_61, %c0_62] : memref<2x8x32xf32, #tpu.memory_space<vmem>>, vector<1x8x32xf32>
    %156 = vector.shape_cast %155 : vector<1x8x32xf32> to vector<8x32xf32>
    %157 = vector.shape_cast %154 : vector<8x32xf32> to vector<1x8x32xf32>
    tpu.vector_store %arg7[%c1_60, %c0_61, %c0_62], %157 {strides = array<i32>} : memref<2x8x32xf32, #tpu.memory_space<vmem>>, vector<1x8x32xf32>,
    return
  }
  func.func @transform_0(%arg0: i32) -> (i32, i32, i32) {
    %c0_i32 = arith.constant 0 : i32
    %c0_i32_0 = arith.constant 0 : i32
    %c0_i32_1 = arith.constant 0 : i32
    return %arg0, %c0_i32, %c0_i32_0 : i32, i32, i32
  }
  func.func @transform_1(%arg0: i32) -> (i32, i32, i32) {
    %c0_i32 = arith.constant 0 : i32
    %c0_i32_0 = arith.constant 0 : i32
    %c0_i32_1 = arith.constant 0 : i32
    return %arg0, %c0_i32, %c0_i32_0 : i32, i32, i32
  }
  func.func @transform_2(%arg0: i32) -> (i32, i32) {
    %c0_i32 = arith.constant 0 : i32
    %c0_i32_0 = arith.constant 0 : i32
    %c0_i32_1 = arith.constant 0 : i32
    return %c0_i32, %c0_i32_0 : i32, i32
  }
  func.func @transform_3(%arg0: i32) -> (i32, i32) {
    %c0_i32 = arith.constant 0 : i32
    %c0_i32_0 = arith.constant 0 : i32
    %c0_i32_1 = arith.constant 0 : i32
    return %c0_i32, %c0_i32_0 : i32, i32
  }
  func.func @transform_4(%arg0: i32) -> (i32, i32) {
    %c0_i32 = arith.constant 0 : i32
    %c0_i32_0 = arith.constant 0 : i32
    %c0_i32_1 = arith.constant 0 : i32
    return %c0_i32, %c0_i32_0 : i32, i32
  }
  func.func @transform_5(%arg0: i32) -> (i32, i32) {
    %c0_i32 = arith.constant 0 : i32
    %c0_i32_0 = arith.constant 0 : i32
    %c0_i32_1 = arith.constant 0 : i32
    return %c0_i32, %c0_i32_0 : i32, i32
  }
  func.func @transform_6(%arg0: i32) -> (i32, i32, i32) {
    %c0_i32 = arith.constant 0 : i32
    %c0_i32_0 = arith.constant 0 : i32
    %c0_i32_1 = arith.constant 0 : i32
    return %arg0, %c0_i32, %c0_i32_0 : i32, i32, i32
  }
}

</mosaic_0001>

<llo_original>
// kernel: tpu_custom_call.1
$region0: #{tpu_custom_call.1}
  #allocation0 [shape = 'u32[]', space=smem, size = 0x4, offset = 0x4, fixed_abs, tag = 'smem constant byte address 0x4 - core index']
  #allocation1 [shape = 'u32[72,128]{1,0:T(1,128)}', space=vmem, size = 0x9000, scoped, tag = 'internal scratch']
  %s0 = inlined_call_operand.hbm [shape: f32[2,8,32], index: 0, kind: input, shape index: {}]
  %s1 = inlined_call_operand.hbm [shape: f32[2,16,32], index: 1, kind: input, shape index: {}]
  %s2 = inlined_call_operand.hbm [shape: f32[32,32], index: 2, kind: input, shape index: {}]
  %s3 = inlined_call_operand.hbm [shape: f32[32,64], index: 3, kind: input, shape index: {}]
  %s4 = inlined_call_operand.hbm [shape: f32[32,32], index: 4, kind: input, shape index: {}]
  %s5 = inlined_call_operand.vmem [shape: f32[1,32], index: 5, kind: input, shape index: {}]
  %s6 = inlined_call_operand.hbm [shape: f32[2,8,32], index: 6, kind: output, shape index: {}]
  %s7 = sld [smem:[#allocation0]]
  $region54: #{tpu_custom_call.1} parent=0
    _
  %s9 = ssub.s32 1, %s7
  %s10 = scalar_select 0, %s9, %s7
  $region1: #{tpu_custom_call.1} parent=0
    #allocation2 [shape = 'u8[8192]{0}', space=vmem, size = 0x2000, scoped, tag = 'input window, operand 0, single buffered']
    #allocation3 [shape = 's32[1]{0}', space=sflag, size = 0x4, scoped, tag = 'scoped memory for tpu_custom_call.1']
    #allocation4 [shape = 's32[1]{0}', space=sflag, size = 0x4, scoped, tag = 'scoped memory for tpu_custom_call.1']
    #allocation5 [shape = 'u8[16384]{0}', space=vmem, size = 0x4000, scoped, tag = 'input window, operand 1, single buffered']
    #allocation6 [shape = 's32[1]{0}', space=sflag, size = 0x4, scoped, tag = 'scoped memory for tpu_custom_call.1']
    #allocation7 [shape = 'u8[16384]{0}', space=vmem, size = 0x4000, scoped, tag = 'input window, operand 2, single buffered']
    #allocation8 [shape = 'u8[16384]{0}', space=vmem, size = 0x4000, scoped, tag = 'input window, operand 3, single buffered']
    #allocation9 [shape = 's32[1]{0}', space=sflag, size = 0x4, scoped, tag = 'scoped memory for tpu_custom_call.1']
    #allocation10 [shape = 'u8[16384]{0}', space=vmem, size = 0x4000, scoped, tag = 'input window, operand 4, single buffered']
    #allocation11 [shape = 'u8[8192]{0}', space=vmem, size = 0x2000, scoped, tag = 'output window, operand 0, single buffered']
    %11 = vsyncpa [#allocation3], 0
    %12 = vsyncpa [#allocation6], 0
    %13 = vsyncpa [#allocation9], 0
    %14 = vsyncpa [#allocation4], 0
    // Predicated region
    $region2: #{tpu_custom_call.1} parent=1 // pred_check
      _
    $region3: #{tpu_custom_call.1} parent=1 // pred_check_branch
      %16 = sbr.rel (0) target = $region5
    $region4: #{tpu_custom_call.1} parent=1 // pred_region
      %18 = vsyncadd [#allocation3], 0
      %s19 = sshll.u32 %s0, 4
      %s20 = int_to_ptr.hbm [resolvable:$true] %s19
      %s21 = sshll.u32 [#allocation2], 4
      %s22 = int_to_ptr.vmem [resolvable:$true] %s21
      %27 = dma.hbm_to_vmem [thread:$0]  %s20, 256, %s22, [#allocation3], 128, 128, 8
    $region5: #{tpu_custom_call.1} parent=1 // pred_fallthru
      _
    // Predicated region
    $region6: #{tpu_custom_call.1} parent=1 // pred_check
      _
    $region7: #{tpu_custom_call.1} parent=1 // pred_check_branch
      %29 = sbr.rel (0) target = $region9
    $region8: #{tpu_custom_call.1} parent=1 // pred_region
      %31 = vsyncadd [#allocation6], 0
      %s32 = sshll.u32 %s1, 4
      %s33 = int_to_ptr.hbm [resolvable:$true] %s32
      %s34 = sshll.u32 [#allocation5], 4
      %s35 = int_to_ptr.vmem [resolvable:$true] %s34
      %40 = dma.hbm_to_vmem [thread:$0]  %s33, 512, %s35, [#allocation6], 128, 128, 8
    $region9: #{tpu_custom_call.1} parent=1 // pred_fallthru
      _
    // Predicated region
    $region10: #{tpu_custom_call.1} parent=1 // pred_check
      _
    $region11: #{tpu_custom_call.1} parent=1 // pred_check_branch
      %42 = sbr.rel (0) target = $region13
    $region12: #{tpu_custom_call.1} parent=1 // pred_region
      %44 = vsyncadd [#allocation6], 0
      %s45 = sshll.u32 %s2, 4
      %s46 = int_to_ptr.hbm [resolvable:$true] %s45
      %s47 = sshll.u32 [#allocation7], 4
      %s48 = int_to_ptr.vmem [resolvable:$true] %s47
      %53 = dma.hbm_to_vmem [thread:$0]  %s46, 512, %s48, [#allocation6], 128, 128, 8
    $region13: #{tpu_custom_call.1} parent=1 // pred_fallthru
      _
    // Predicated region
    $region14: #{tpu_custom_call.1} parent=1 // pred_check
      _
    $region15: #{tpu_custom_call.1} parent=1 // pred_check_branch
      %55 = sbr.rel (0) target = $region17
    $region16: #{tpu_custom_call.1} parent=1 // pred_region
      %57 = vsyncadd [#allocation9], 0
      %s58 = sshll.u32 %s3, 4
      %s59 = int_to_ptr.hbm [resolvable:$true] %s58
      %s60 = sshll.u32 [#allocation8], 4
      %s61 = int_to_ptr.vmem [resolvable:$true] %s60
      %66 = dma.hbm_to_vmem [thread:$0]  %s59, 512, %s61, [#allocation9], 128, 128, 8
    $region17: #{tpu_custom_call.1} parent=1 // pred_fallthru
      _
    // Predicated region
    $region18: #{tpu_custom_call.1} parent=1 // pred_check
      _
    $region19: #{tpu_custom_call.1} parent=1 // pred_check_branch
      %68 = sbr.rel (0) target = $region21
    $region20: #{tpu_custom_call.1} parent=1 // pred_region
      %70 = vsyncadd [#allocation9], 0
      %s71 = sshll.u32 %s4, 4
      %s72 = int_to_ptr.hbm [resolvable:$true] %s71
      %s73 = sshll.u32 [#allocation10], 4
      %s74 = int_to_ptr.vmem [resolvable:$true] %s73
      %79 = dma.hbm_to_vmem [thread:$0]  %s72, 512, %s74, [#allocation9], 128, 128, 8
    $region21: #{tpu_custom_call.1} parent=1 // pred_fallthru
      _
    // Predicated region
    $region22: #{tpu_custom_call.1} parent=1 // pred_check
      _
    $region23: #{tpu_custom_call.1} parent=1 // pred_check_branch
      %81 = sbr.rel (0) target = $region25
    $region24: #{tpu_custom_call.1} parent=1 // pred_region
      _
    $region25: #{tpu_custom_call.1} parent=1 // pred_fallthru
      _
    // Predicated region
    $region26: #{tpu_custom_call.1} parent=1 // pred_check
      _
    $region27: #{tpu_custom_call.1} parent=1 // pred_check_branch
      %83 = sbr.rel (0) target = $region29
    $region28: #{tpu_custom_call.1} parent=1 // pred_region
      %85 = dma.done [#allocation3], 256
    $region29: #{tpu_custom_call.1} parent=1 // pred_fallthru
      _
    // Predicated region
    $region30: #{tpu_custom_call.1} parent=1 // pred_check
      _
    $region31: #{tpu_custom_call.1} parent=1 // pred_check_branch
      %87 = sbr.rel (0) target = $region33
    $region32: #{tpu_custom_call.1} parent=1 // pred_region
      %89 = dma.done [#allocation6], 512
    $region33: #{tpu_custom_call.1} parent=1 // pred_fallthru
      _
    // Predicated region
    $region34: #{tpu_custom_call.1} parent=1 // pred_check
      _
    $region35: #{tpu_custom_call.1} parent=1 // pred_check_branch
      %91 = sbr.rel (0) target = $region37
    $region36: #{tpu_custom_call.1} parent=1 // pred_region
      %93 = dma.done [#allocation6], 512
    $region37: #{tpu_custom_call.1} parent=1 // pred_fallthru
      _
    // Predicated region
    $region38: #{tpu_custom_call.1} parent=1 // pred_check
      _
    $region39: #{tpu_custom_call.1} parent=1 // pred_check_branch
      %95 = sbr.rel (0) target = $region41
    $region40: #{tpu_custom_call.1} parent=1 // pred_region
      %97 = dma.done [#allocation9], 512
    $region41: #{tpu_custom_call.1} parent=1 // pred_fallthru
      _
    // Predicated region
    $region42: #{tpu_custom_call.1} parent=1 // pred_check
      _
    $region43: #{tpu_custom_call.1} parent=1 // pred_check_branch
      %99 = sbr.rel (0) target = $region45
    $region44: #{tpu_custom_call.1} parent=1 // pred_region
      %101 = dma.done [#allocation9], 512
    $region45: #{tpu_custom_call.1} parent=1 // pred_fallthru
      _
    %v102 = vld [vmem:[#allocation7] sm:$0xff]
    %v103 = vld [vmem:[#allocation7 + $0x8] sm:$0xff]
    %v104 = vld [vmem:[#allocation7 + $0x10] sm:$0xff]
    %v105 = vld [vmem:[#allocation7 + $0x18] sm:$0xff]
    %v106 = vld [vmem:[#allocation8] sm:$0xff]
    %v107 = vld [vmem:[#allocation8 + $0x8] sm:$0xff]
    %v108 = vld [vmem:[#allocation8 + $0x10] sm:$0xff]
    %v109 = vld [vmem:[#allocation8 + $0x18] sm:$0xff]
    %v110 = vld [vmem:[#allocation10] sm:$0xff]
    %v111 = vld [vmem:[#allocation10 + $0x8] sm:$0xff]
    %v112 = vld [vmem:[#allocation10 + $0x10] sm:$0xff]
    %v113 = vld [vmem:[#allocation10 + $0x18] sm:$0xff]
    %v114 = vld [vmem:[%s5] sm:$0x1]
    %v115 = vld [vmem:[#allocation2] sm:$0xff]
    %v116 = vld [vmem:[#allocation5] sm:$0xff]
    %v117 = vld [vmem:[#allocation5 + $0x8] sm:$0xff]
    %vm118 = vcmask 261120
    %v120 = vsel %vm118, %v115, 0
    %122 = vmatpush.msra.mxu0 0.0
    %123 = vmatpush.msra.mxu0 0.0
    %124 = vmatpush.msra.mxu0 0.0
    %125 = vmatpush.msra.mxu0 0.0
    %126 = vmatpush.msra.mxu0 0.0
    %127 = vmatpush.msra.mxu0 0.0
    %128 = vmatpush.msra.mxu0 0.0
    %129 = vmatpush.msra.mxu0 0.0
    %130 = vmatpush.msra.mxu0 0.0
    %131 = vmatpush.msra.mxu0 0.0
    %132 = vmatpush.msra.mxu0 0.0
    %133 = vmatpush.msra.mxu0 0.0
    %134 = vmatpush.msra.mxu0 %v105
    %135 = vmatpush.msra.mxu0 %v104
    %136 = vmatpush.msra.mxu0 %v103
    %137 = vmatpush.msra.mxu0 %v102
    %138 = vmatmul.f32.gmra.mxu0 %v120
    %v139 = vpop.f32.mrf.mxu0
    %v140 = vadd.f32 0.0, %v139
    %141 = vdwg.mxu0
    %v142 = vmul.f32 %v140, 0.35355338
    %v144 = vsel %vm118, %v116, 0
    %v147 = vsel %vm118, %v117, 0
    %149 = vmatpush.msra.mxu0 0.0
    %150 = vmatpush.msra.mxu0 0.0
    %151 = vmatpush.msra.mxu0 0.0
    %152 = vmatpush.msra.mxu0 0.0
    %153 = vmatpush.msra.mxu0 0.0
    %154 = vmatpush.msra.mxu0 0.0
    %155 = vmatpush.msra.mxu0 0.0
    %156 = vmatpush.msra.mxu0 0.0
    %157 = vmatpush.msra.mxu0 0.0
    %158 = vmatpush.msra.mxu0 0.0
    %159 = vmatpush.msra.mxu0 0.0
    %160 = vmatpush.msra.mxu0 0.0
    %161 = vmatpush.msra.mxu0 %v109
    %162 = vmatpush.msra.mxu0 %v108
    %163 = vmatpush.msra.mxu0 %v107
    %164 = vmatpush.msra.mxu0 %v106
    %165 = vmatmul.f32.gmra.mxu0 %v144
    %v166 = vpop.f32.mrf.mxu0
    %v167 = vadd.f32 0.0, %v166
    %168 = vmatmul.f32.gmra.mxu0 %v147
    %v169 = vpop.f32.mrf.mxu0
    %v170 = vadd.f32 0.0, %v169
    %171 = vdwg.mxu0
    %vm172 = vcmask 64512
    %v174 = vsel %vm172, %v142, 0
    %v177 = vsel %vm172, %v167, 0
    %v180 = vsel %vm172, %v170, 0
    %182 = vmatpush.xpose.msra.mxu0 0.0
    %183 = vmatpush.xpose.msra.mxu0 0.0
    %184 = vmatpush.xpose.msra.mxu0 0.0
    %185 = vmatpush.xpose.msra.mxu0 0.0
    %186 = vmatpush.xpose.msra.mxu0 0.0
    %187 = vmatpush.xpose.msra.mxu0 0.0
    %188 = vmatpush.xpose.msra.mxu0 0.0
    %189 = vmatpush.xpose.msra.mxu0 0.0
    %190 = vmatpush.xpose.msra.mxu0 0.0
    %191 = vmatpush.xpose.msra.mxu0 0.0
    %192 = vmatpush.xpose.msra.mxu0 0.0
    %193 = vmatpush.xpose.msra.mxu0 0.0
    %194 = vmatpush.xpose.msra.mxu0 0.0
    %195 = vmatpush.xpose.msra.mxu0 0.0
    %196 = vmatpush.xpose.msra.mxu0 %v180
    %197 = vmatpush.xpose.msra.mxu0 %v177
    %198 = vmatmul.f32.gmra.mxu0 %v174
    %v199 = vpop.f32.mrf.mxu0
    %v200 = vadd.f32 0.0, %v199
    %201 = vdwg.mxu0
    %vm202 = vcmask 130048
    %v203 = vsel %vm202, %v200, -inf
    %204 = vmax.xlane.f32.xlu0 %v203
    %v205 = vpop.xlane.xlu0 %204
    %v206 = vsub.f32 %v200, %v205
    %v207 = vmul.f32 %v206, 1.442695
    %v208 = vpow.pop %v207
    %v209 = vsel %vm202, %v208, 0.0
    %210 = vadd.xlane.f32.xlu0 %v209
    %v211 = vpop.xlane.xlu0 %210
    %212 = vrot.lane.b32.xlu0 %v167, 96
    %v213 = vpop.permute.xlu0 %212
    %214 = vrot.lane.b32.xlu0 %v170, 96
    %v215 = vpop.permute.xlu0 %214
    %v219 = vsel %vm202, %v208, 0
    %221 = vmatpush.msra.mxu0 0.0
    %222 = vmatpush.msra.mxu0 0.0
    %223 = vmatpush.msra.mxu0 0.0
    %224 = vmatpush.msra.mxu0 0.0
    %225 = vmatpush.msra.mxu0 0.0
    %226 = vmatpush.msra.mxu0 0.0
    %227 = vmatpush.msra.mxu0 0.0
    %228 = vmatpush.msra.mxu0 0.0
    %229 = vmatpush.msra.mxu0 0.0
    %230 = vmatpush.msra.mxu0 0.0
    %231 = vmatpush.msra.mxu0 0.0
    %232 = vmatpush.msra.mxu0 0.0
    %233 = vmatpush.msra.mxu0 0.0
    %234 = vmatpush.msra.mxu0 0.0
    %235 = vmatpush.msra.mxu0 %v215
    %236 = vmatpush.msra.mxu0 %v213
    %237 = vmatmul.f32.gmra.mxu0 %v219
    %v238 = vpop.f32.mrf.mxu0
    %v239 = vadd.f32 0.0, %v238
    %240 = vdwg.mxu0
    %v241 = vrcp.pop %v211
    %v242 = vmul.f32 %v211, %v241
    %v243 = vsub.f32 1.0, %v242
    %v244 = vmul.f32 %v241, %v243
    %v245 = vadd.f32 %v241, %v244
    %vm246 = vweird.f32 %v211
    %vm247 = vweird.f32 %v241
    %vm248 = vmor %vm246, %vm247
    %v249 = vsel %vm248, %v241, %v245
    %v250 = vand.u32 2147483647, %v211
    %vm251 = vcmp.eq.f32.partialorder %v250, 8.507059e+37
    %v252 = vand.u32 %v211, 2147483648
    %v253 = vor.u32 1.1754944e-38, %v252
    %v254 = vsel %vm251, %v253, %v249
    %v255 = vmul.f32 %v239, %v254
    %256 = vrot.lane.b32.xlu0 %v142, 120
    %v257 = vpop.permute.xlu0 %256
    %258 = vrot.lane.b32.xlu0 %v167, 120
    %v259 = vpop.permute.xlu0 %258
    %260 = vrot.lane.b32.xlu0 %v170, 120
    %v261 = vpop.permute.xlu0 %260
    %v262 = vsel %vm172, %v257, 0
    %v264 = vsel %vm172, %v259, 0
    %v266 = vsel %vm172, %v261, 0
    %268 = vmatpush.xpose.msra.mxu0 0.0
    %269 = vmatpush.xpose.msra.mxu0 0.0
    %270 = vmatpush.xpose.msra.mxu0 0.0
    %271 = vmatpush.xpose.msra.mxu0 0.0
    %272 = vmatpush.xpose.msra.mxu0 0.0
    %273 = vmatpush.xpose.msra.mxu0 0.0
    %274 = vmatpush.xpose.msra.mxu0 0.0
    %275 = vmatpush.xpose.msra.mxu0 0.0
    %276 = vmatpush.xpose.msra.mxu0 0.0
    %277 = vmatpush.xpose.msra.mxu0 0.0
    %278 = vmatpush.xpose.msra.mxu0 0.0
    %279 = vmatpush.xpose.msra.mxu0 0.0
    %280 = vmatpush.xpose.msra.mxu0 0.0
    %281 = vmatpush.xpose.msra.mxu0 0.0
    %282 = vmatpush.xpose.msra.mxu0 %v266
    %283 = vmatpush.xpose.msra.mxu0 %v264
    %284 = vmatmul.f32.gmra.mxu0 %v262
    %v285 = vpop.f32.mrf.mxu0
    %v286 = vadd.f32 0.0, %v285
    %287 = vdwg.mxu0
    %v288 = vsel %vm202, %v286, -inf
    %289 = vmax.xlane.f32.xlu0 %v288
    %v290 = vpop.xlane.xlu0 %289
    %v291 = vsub.f32 %v286, %v290
    %v292 = vmul.f32 %v291, 1.442695
    %v293 = vpow.pop %v292
    %v294 = vsel %vm202, %v293, 0.0
    %295 = vadd.xlane.f32.xlu0 %v294
    %v296 = vpop.xlane.xlu0 %295
    %297 = vrot.lane.b32.xlu0 %v167, 88
    %v298 = vpop.permute.xlu0 %297
    %299 = vrot.lane.b32.xlu0 %v170, 88
    %v300 = vpop.permute.xlu0 %299
    %v304 = vsel %vm202, %v293, 0
    %306 = vmatpush.msra.mxu0 0.0
    %307 = vmatpush.msra.mxu0 0.0
    %308 = vmatpush.msra.mxu0 0.0
    %309 = vmatpush.msra.mxu0 0.0
    %310 = vmatpush.msra.mxu0 0.0
    %311 = vmatpush.msra.mxu0 0.0
    %312 = vmatpush.msra.mxu0 0.0
    %313 = vmatpush.msra.mxu0 0.0
    %314 = vmatpush.msra.mxu0 0.0
    %315 = vmatpush.msra.mxu0 0.0
    %316 = vmatpush.msra.mxu0 0.0
    %317 = vmatpush.msra.mxu0 0.0
    %318 = vmatpush.msra.mxu0 0.0
    %319 = vmatpush.msra.mxu0 0.0
    %320 = vmatpush.msra.mxu0 %v300
    %321 = vmatpush.msra.mxu0 %v298
    %322 = vmatmul.f32.gmra.mxu0 %v304
    %v323 = vpop.f32.mrf.mxu0
    %v324 = vadd.f32 0.0, %v323
    %325 = vdwg.mxu0
    %v326 = vrcp.pop %v296
    %v327 = vmul.f32 %v296, %v326
    %v328 = vsub.f32 1.0, %v327
    %v329 = vmul.f32 %v326, %v328
    %v330 = vadd.f32 %v326, %v329
    %vm331 = vweird.f32 %v296
    %vm332 = vweird.f32 %v326
    %vm333 = vmor %vm331, %vm332
    %v334 = vsel %vm333, %v326, %v330
    %v335 = vand.u32 2147483647, %v296
    %vm336 = vcmp.eq.f32.partialorder %v335, 8.507059e+37
    %v337 = vand.u32 %v296, 2147483648
    %v338 = vor.u32 1.1754944e-38, %v337
    %v339 = vsel %vm336, %v338, %v334
    %v340 = vmul.f32 %v324, %v339
    %341 = vrot.lane.b32.xlu0 %v142, 112
    %v342 = vpop.permute.xlu0 %341
    %343 = vrot.lane.b32.xlu0 %v167, 112
    %v344 = vpop.permute.xlu0 %343
    %345 = vrot.lane.b32.xlu0 %v170, 112
    %v346 = vpop.permute.xlu0 %345
    %v347 = vsel %vm172, %v342, 0
    %v349 = vsel %vm172, %v344, 0
    %v351 = vsel %vm172, %v346, 0
    %353 = vmatpush.xpose.msra.mxu0 0.0
    %354 = vmatpush.xpose.msra.mxu0 0.0
    %355 = vmatpush.xpose.msra.mxu0 0.0
    %356 = vmatpush.xpose.msra.mxu0 0.0
    %357 = vmatpush.xpose.msra.mxu0 0.0
    %358 = vmatpush.xpose.msra.mxu0 0.0
    %359 = vmatpush.xpose.msra.mxu0 0.0
    %360 = vmatpush.xpose.msra.mxu0 0.0
    %361 = vmatpush.xpose.msra.mxu0 0.0
    %362 = vmatpush.xpose.msra.mxu0 0.0
    %363 = vmatpush.xpose.msra.mxu0 0.0
    %364 = vmatpush.xpose.msra.mxu0 0.0
    %365 = vmatpush.xpose.msra.mxu0 0.0
    %366 = vmatpush.xpose.msra.mxu0 0.0
    %367 = vmatpush.xpose.msra.mxu0 %v351
    %368 = vmatpush.xpose.msra.mxu0 %v349
    %369 = vmatmul.f32.gmra.mxu0 %v347
    %v370 = vpop.f32.mrf.mxu0
    %v371 = vadd.f32 0.0, %v370
    %372 = vdwg.mxu0
    %v373 = vsel %vm202, %v371, -inf
    %374 = vmax.xlane.f32.xlu0 %v373
    %v375 = vpop.xlane.xlu0 %374
    %v376 = vsub.f32 %v371, %v375
    %v377 = vmul.f32 %v376, 1.442695
    %v378 = vpow.pop %v377
    %v379 = vsel %vm202, %v378, 0.0
    %380 = vadd.xlane.f32.xlu0 %v379
    %v381 = vpop.xlane.xlu0 %380
    %382 = vrot.lane.b32.xlu0 %v167, 80
    %v383 = vpop.permute.xlu0 %382
    %384 = vrot.lane.b32.xlu0 %v170, 80
    %v385 = vpop.permute.xlu0 %384
    %v389 = vsel %vm202, %v378, 0
    %391 = vmatpush.msra.mxu0 0.0
    %392 = vmatpush.msra.mxu0 0.0
    %393 = vmatpush.msra.mxu0 0.0
    %394 = vmatpush.msra.mxu0 0.0
    %395 = vmatpush.msra.mxu0 0.0
    %396 = vmatpush.msra.mxu0 0.0
    %397 = vmatpush.msra.mxu0 0.0
    %398 = vmatpush.msra.mxu0 0.0
    %399 = vmatpush.msra.mxu0 0.0
    %400 = vmatpush.msra.mxu0 0.0
    %401 = vmatpush.msra.mxu0 0.0
    %402 = vmatpush.msra.mxu0 0.0
    %403 = vmatpush.msra.mxu0 0.0
    %404 = vmatpush.msra.mxu0 0.0
    %405 = vmatpush.msra.mxu0 %v385
    %406 = vmatpush.msra.mxu0 %v383
    %407 = vmatmul.f32.gmra.mxu0 %v389
    %v408 = vpop.f32.mrf.mxu0
    %v409 = vadd.f32 0.0, %v408
    %410 = vdwg.mxu0
    %v411 = vrcp.pop %v381
    %v412 = vmul.f32 %v381, %v411
    %v413 = vsub.f32 1.0, %v412
    %v414 = vmul.f32 %v411, %v413
    %v415 = vadd.f32 %v411, %v414
    %vm416 = vweird.f32 %v381
    %vm417 = vweird.f32 %v411
    %vm418 = vmor %vm416, %vm417
    %v419 = vsel %vm418, %v411, %v415
    %v420 = vand.u32 2147483647, %v381
    %vm421 = vcmp.eq.f32.partialorder %v420, 8.507059e+37
    %v422 = vand.u32 %v381, 2147483648
    %v423 = vor.u32 1.1754944e-38, %v422
    %v424 = vsel %vm421, %v423, %v419
    %v425 = vmul.f32 %v409, %v424
    %426 = vrot.lane.b32.xlu0 %v142, 104
    %v427 = vpop.permute.xlu0 %426
    %428 = vrot.lane.b32.xlu0 %v167, 104
    %v429 = vpop.permute.xlu0 %428
    %430 = vrot.lane.b32.xlu0 %v170, 104
    %v431 = vpop.permute.xlu0 %430
    %v432 = vsel %vm172, %v427, 0
    %v434 = vsel %vm172, %v429, 0
    %v436 = vsel %vm172, %v431, 0
    %438 = vmatpush.xpose.msra.mxu0 0.0
    %439 = vmatpush.xpose.msra.mxu0 0.0
    %440 = vmatpush.xpose.msra.mxu0 0.0
    %441 = vmatpush.xpose.msra.mxu0 0.0
    %442 = vmatpush.xpose.msra.mxu0 0.0
    %443 = vmatpush.xpose.msra.mxu0 0.0
    %444 = vmatpush.xpose.msra.mxu0 0.0
    %445 = vmatpush.xpose.msra.mxu0 0.0
    %446 = vmatpush.xpose.msra.mxu0 0.0
    %447 = vmatpush.xpose.msra.mxu0 0.0
    %448 = vmatpush.xpose.msra.mxu0 0.0
    %449 = vmatpush.xpose.msra.mxu0 0.0
    %450 = vmatpush.xpose.msra.mxu0 0.0
    %451 = vmatpush.xpose.msra.mxu0 0.0
    %452 = vmatpush.xpose.msra.mxu0 %v436
    %453 = vmatpush.xpose.msra.mxu0 %v434
    %454 = vmatmul.f32.gmra.mxu0 %v432
    %v455 = vpop.f32.mrf.mxu0
    %v456 = vadd.f32 0.0, %v455
    %457 = vdwg.mxu0
    %v458 = vsel %vm202, %v456, -inf
    %459 = vmax.xlane.f32.xlu0 %v458
    %v460 = vpop.xlane.xlu0 %459
    %v461 = vsub.f32 %v456, %v460
    %v462 = vmul.f32 %v461, 1.442695
    %v463 = vpow.pop %v462
    %v464 = vsel %vm202, %v463, 0.0
    %465 = vadd.xlane.f32.xlu0 %v464
    %v466 = vpop.xlane.xlu0 %465
    %467 = vrot.lane.b32.xlu0 %v167, 72
    %v468 = vpop.permute.xlu0 %467
    %469 = vrot.lane.b32.xlu0 %v170, 72
    %v470 = vpop.permute.xlu0 %469
    %v474 = vsel %vm202, %v463, 0
    %476 = vmatpush.msra.mxu0 0.0
    %477 = vmatpush.msra.mxu0 0.0
    %478 = vmatpush.msra.mxu0 0.0
    %479 = vmatpush.msra.mxu0 0.0
    %480 = vmatpush.msra.mxu0 0.0
    %481 = vmatpush.msra.mxu0 0.0
    %482 = vmatpush.msra.mxu0 0.0
    %483 = vmatpush.msra.mxu0 0.0
    %484 = vmatpush.msra.mxu0 0.0
    %485 = vmatpush.msra.mxu0 0.0
    %486 = vmatpush.msra.mxu0 0.0
    %487 = vmatpush.msra.mxu0 0.0
    %488 = vmatpush.msra.mxu0 0.0
    %489 = vmatpush.msra.mxu0 0.0
    %490 = vmatpush.msra.mxu0 %v470
    %491 = vmatpush.msra.mxu0 %v468
    %492 = vmatmul.f32.gmra.mxu0 %v474
    %v493 = vpop.f32.mrf.mxu0
    %v494 = vadd.f32 0.0, %v493
    %495 = vdwg.mxu0
    %v496 = vrcp.pop %v466
    %v497 = vmul.f32 %v466, %v496
    %v498 = vsub.f32 1.0, %v497
    %v499 = vmul.f32 %v496, %v498
    %v500 = vadd.f32 %v496, %v499
    %vm501 = vweird.f32 %v466
    %vm502 = vweird.f32 %v496
    %vm503 = vmor %vm501, %vm502
    %v504 = vsel %vm503, %v496, %v500
    %v505 = vand.u32 2147483647, %v466
    %vm506 = vcmp.eq.f32.partialorder %v505, 8.507059e+37
    %v507 = vand.u32 %v466, 2147483648
    %v508 = vor.u32 1.1754944e-38, %v507
    %v509 = vsel %vm506, %v508, %v504
    %v510 = vmul.f32 %v494, %v509
    %512 = vrot.lane.b32.xlu0 %v340, 8
    %v513 = vpop.permute.xlu0 %512
    %516 = vrot.lane.b32.xlu0 %v425, 16
    %v517 = vpop.permute.xlu0 %516
    %520 = vrot.lane.b32.xlu0 %v510, 24
    %v521 = vpop.permute.xlu0 %520
    %v523 = vsel %vm172, %v255, %v513
    %v524 = vsel %vm202, %v523, %v517
    %vm525 = vcmask 195584
    %v526 = vsel %vm525, %v524, %v521
    %v528 = vperm.slane %v114, 0
    %v531 = vsel %vm118, %v526, 0
    %533 = vmatpush.msra.mxu0 0.0
    %534 = vmatpush.msra.mxu0 0.0
    %535 = vmatpush.msra.mxu0 0.0
    %536 = vmatpush.msra.mxu0 0.0
    %537 = vmatpush.msra.mxu0 0.0
    %538 = vmatpush.msra.mxu0 0.0
    %539 = vmatpush.msra.mxu0 0.0
    %540 = vmatpush.msra.mxu0 0.0
    %541 = vmatpush.msra.mxu0 0.0
    %542 = vmatpush.msra.mxu0 0.0
    %543 = vmatpush.msra.mxu0 0.0
    %544 = vmatpush.msra.mxu0 0.0
    %545 = vmatpush.msra.mxu0 %v113
    %546 = vmatpush.msra.mxu0 %v112
    %547 = vmatpush.msra.mxu0 %v111
    %548 = vmatpush.msra.mxu0 %v110
    %549 = vmatmul.f32.gmra.mxu0 %v531
    %v550 = vpop.f32.mrf.mxu0
    %v551 = vadd.f32 %v528, %v550
    %552 = vdwg.mxu0
    %553 = vst.msk [vmem:[#allocation11] sm:$0xff] %vm118, %v551
    %s554 = scalar_lea.vmem [#allocation2], 8
    %v555 = vld [vmem:[%s554] sm:$0xff]
    %s556 = scalar_lea.vmem [#allocation5], 16
    %v557 = vld [vmem:[%s556] sm:$0xff]
    %v558 = vld [vmem:[%s556 + $0x8] sm:$0xff]
    %v560 = vsel %vm118, %v555, 0
    %562 = vmatpush.msra.mxu0 0.0
    %563 = vmatpush.msra.mxu0 0.0
    %564 = vmatpush.msra.mxu0 0.0
    %565 = vmatpush.msra.mxu0 0.0
    %566 = vmatpush.msra.mxu0 0.0
    %567 = vmatpush.msra.mxu0 0.0
    %568 = vmatpush.msra.mxu0 0.0
    %569 = vmatpush.msra.mxu0 0.0
    %570 = vmatpush.msra.mxu0 0.0
    %571 = vmatpush.msra.mxu0 0.0
    %572 = vmatpush.msra.mxu0 0.0
    %573 = vmatpush.msra.mxu0 0.0
    %574 = vmatpush.msra.mxu0 %v105
    %575 = vmatpush.msra.mxu0 %v104
    %576 = vmatpush.msra.mxu0 %v103
    %577 = vmatpush.msra.mxu0 %v102
    %578 = vmatmul.f32.gmra.mxu0 %v560
    %v579 = vpop.f32.mrf.mxu0
    %v580 = vadd.f32 0.0, %v579
    %581 = vdwg.mxu0
    %v582 = vmul.f32 %v580, 0.35355338
    %v584 = vsel %vm118, %v557, 0
    %v587 = vsel %vm118, %v558, 0
    %589 = vmatpush.msra.mxu0 0.0
    %590 = vmatpush.msra.mxu0 0.0
    %591 = vmatpush.msra.mxu0 0.0
    %592 = vmatpush.msra.mxu0 0.0
    %593 = vmatpush.msra.mxu0 0.0
    %594 = vmatpush.msra.mxu0 0.0
    %595 = vmatpush.msra.mxu0 0.0
    %596 = vmatpush.msra.mxu0 0.0
    %597 = vmatpush.msra.mxu0 0.0
    %598 = vmatpush.msra.mxu0 0.0
    %599 = vmatpush.msra.mxu0 0.0
    %600 = vmatpush.msra.mxu0 0.0
    %601 = vmatpush.msra.mxu0 %v109
    %602 = vmatpush.msra.mxu0 %v108
    %603 = vmatpush.msra.mxu0 %v107
    %604 = vmatpush.msra.mxu0 %v106
    %605 = vmatmul.f32.gmra.mxu0 %v584
    %v606 = vpop.f32.mrf.mxu0
    %v607 = vadd.f32 0.0, %v606
    %608 = vmatmul.f32.gmra.mxu0 %v587
    %v609 = vpop.f32.mrf.mxu0
    %v610 = vadd.f32 0.0, %v609
    %611 = vdwg.mxu0
    %v613 = vsel %vm172, %v582, 0
    %v616 = vsel %vm172, %v607, 0
    %v619 = vsel %vm172, %v610, 0
    %621 = vmatpush.xpose.msra.mxu0 0.0
    %622 = vmatpush.xpose.msra.mxu0 0.0
    %623 = vmatpush.xpose.msra.mxu0 0.0
    %624 = vmatpush.xpose.msra.mxu0 0.0
    %625 = vmatpush.xpose.msra.mxu0 0.0
    %626 = vmatpush.xpose.msra.mxu0 0.0
    %627 = vmatpush.xpose.msra.mxu0 0.0
    %628 = vmatpush.xpose.msra.mxu0 0.0
    %629 = vmatpush.xpose.msra.mxu0 0.0
    %630 = vmatpush.xpose.msra.mxu0 0.0
    %631 = vmatpush.xpose.msra.mxu0 0.0
    %632 = vmatpush.xpose.msra.mxu0 0.0
    %633 = vmatpush.xpose.msra.mxu0 0.0
    %634 = vmatpush.xpose.msra.mxu0 0.0
    %635 = vmatpush.xpose.msra.mxu0 %v619
    %636 = vmatpush.xpose.msra.mxu0 %v616
    %637 = vmatmul.f32.gmra.mxu0 %v613
    %v638 = vpop.f32.mrf.mxu0
    %v639 = vadd.f32 0.0, %v638
    %640 = vdwg.mxu0
    %v641 = vsel %vm202, %v639, -inf
    %642 = vmax.xlane.f32.xlu0 %v641
    %v643 = vpop.xlane.xlu0 %642
    %v644 = vsub.f32 %v639, %v643
    %v645 = vmul.f32 %v644, 1.442695
    %v646 = vpow.pop %v645
    %v647 = vsel %vm202, %v646, 0.0
    %648 = vadd.xlane.f32.xlu0 %v647
    %v649 = vpop.xlane.xlu0 %648
    %650 = vrot.lane.b32.xlu0 %v607, 96
    %v651 = vpop.permute.xlu0 %650
    %652 = vrot.lane.b32.xlu0 %v610, 96
    %v653 = vpop.permute.xlu0 %652
    %v657 = vsel %vm202, %v646, 0
    %659 = vmatpush.msra.mxu0 0.0
    %660 = vmatpush.msra.mxu0 0.0
    %661 = vmatpush.msra.mxu0 0.0
    %662 = vmatpush.msra.mxu0 0.0
    %663 = vmatpush.msra.mxu0 0.0
    %664 = vmatpush.msra.mxu0 0.0
    %665 = vmatpush.msra.mxu0 0.0
    %666 = vmatpush.msra.mxu0 0.0
    %667 = vmatpush.msra.mxu0 0.0
    %668 = vmatpush.msra.mxu0 0.0
    %669 = vmatpush.msra.mxu0 0.0
    %670 = vmatpush.msra.mxu0 0.0
    %671 = vmatpush.msra.mxu0 0.0
    %672 = vmatpush.msra.mxu0 0.0
    %673 = vmatpush.msra.mxu0 %v653
    %674 = vmatpush.msra.mxu0 %v651
    %675 = vmatmul.f32.gmra.mxu0 %v657
    %v676 = vpop.f32.mrf.mxu0
    %v677 = vadd.f32 0.0, %v676
    %678 = vdwg.mxu0
    %v679 = vrcp.pop %v649
    %v680 = vmul.f32 %v649, %v679
    %v681 = vsub.f32 1.0, %v680
    %v682 = vmul.f32 %v679, %v681
    %v683 = vadd.f32 %v679, %v682
    %vm684 = vweird.f32 %v649
    %vm685 = vweird.f32 %v679
    %vm686 = vmor %vm684, %vm685
    %v687 = vsel %vm686, %v679, %v683
    %v688 = vand.u32 2147483647, %v649
    %vm689 = vcmp.eq.f32.partialorder %v688, 8.507059e+37
    %v690 = vand.u32 %v649, 2147483648
    %v691 = vor.u32 1.1754944e-38, %v690
    %v692 = vsel %vm689, %v691, %v687
    %v693 = vmul.f32 %v677, %v692
    %694 = vrot.lane.b32.xlu0 %v582, 120
    %v695 = vpop.permute.xlu0 %694
    %696 = vrot.lane.b32.xlu0 %v607, 120
    %v697 = vpop.permute.xlu0 %696
    %698 = vrot.lane.b32.xlu0 %v610, 120
    %v699 = vpop.permute.xlu0 %698
    %v700 = vsel %vm172, %v695, 0
    %v702 = vsel %vm172, %v697, 0
    %v704 = vsel %vm172, %v699, 0
    %706 = vmatpush.xpose.msra.mxu0 0.0
    %707 = vmatpush.xpose.msra.mxu0 0.0
    %708 = vmatpush.xpose.msra.mxu0 0.0
    %709 = vmatpush.xpose.msra.mxu0 0.0
    %710 = vmatpush.xpose.msra.mxu0 0.0
    %711 = vmatpush.xpose.msra.mxu0 0.0
    %712 = vmatpush.xpose.msra.mxu0 0.0
    %713 = vmatpush.xpose.msra.mxu0 0.0
    %714 = vmatpush.xpose.msra.mxu0 0.0
    %715 = vmatpush.xpose.msra.mxu0 0.0
    %716 = vmatpush.xpose.msra.mxu0 0.0
    %717 = vmatpush.xpose.msra.mxu0 0.0
    %718 = vmatpush.xpose.msra.mxu0 0.0
    %719 = vmatpush.xpose.msra.mxu0 0.0
    %720 = vmatpush.xpose.msra.mxu0 %v704
    %721 = vmatpush.xpose.msra.mxu0 %v702
    %722 = vmatmul.f32.gmra.mxu0 %v700
    %v723 = vpop.f32.mrf.mxu0
    %v724 = vadd.f32 0.0, %v723
    %725 = vdwg.mxu0
    %v726 = vsel %vm202, %v724, -inf
    %727 = vmax.xlane.f32.xlu0 %v726
    %v728 = vpop.xlane.xlu0 %727
    %v729 = vsub.f32 %v724, %v728
    %v730 = vmul.f32 %v729, 1.442695
    %v731 = vpow.pop %v730
    %v732 = vsel %vm202, %v731, 0.0
    %733 = vadd.xlane.f32.xlu0 %v732
    %v734 = vpop.xlane.xlu0 %733
    %735 = vrot.lane.b32.xlu0 %v607, 88
    %v736 = vpop.permute.xlu0 %735
    %737 = vrot.lane.b32.xlu0 %v610, 88
    %v738 = vpop.permute.xlu0 %737
    %v742 = vsel %vm202, %v731, 0
    %744 = vmatpush.msra.mxu0 0.0
    %745 = vmatpush.msra.mxu0 0.0
    %746 = vmatpush.msra.mxu0 0.0
    %747 = vmatpush.msra.mxu0 0.0
    %748 = vmatpush.msra.mxu0 0.0
    %749 = vmatpush.msra.mxu0 0.0
    %750 = vmatpush.msra.mxu0 0.0
    %751 = vmatpush.msra.mxu0 0.0
    %752 = vmatpush.msra.mxu0 0.0
    %753 = vmatpush.msra.mxu0 0.0
    %754 = vmatpush.msra.mxu0 0.0
    %755 = vmatpush.msra.mxu0 0.0
    %756 = vmatpush.msra.mxu0 0.0
    %757 = vmatpush.msra.mxu0 0.0
    %758 = vmatpush.msra.mxu0 %v738
    %759 = vmatpush.msra.mxu0 %v736
    %760 = vmatmul.f32.gmra.mxu0 %v742
    %v761 = vpop.f32.mrf.mxu0
    %v762 = vadd.f32 0.0, %v761
    %763 = vdwg.mxu0
    %v764 = vrcp.pop %v734
    %v765 = vmul.f32 %v734, %v764
    %v766 = vsub.f32 1.0, %v765
    %v767 = vmul.f32 %v764, %v766
    %v768 = vadd.f32 %v764, %v767
    %vm769 = vweird.f32 %v734
    %vm770 = vweird.f32 %v764
    %vm771 = vmor %vm769, %vm770
    %v772 = vsel %vm771, %v764, %v768
    %v773 = vand.u32 2147483647, %v734
    %vm774 = vcmp.eq.f32.partialorder %v773, 8.507059e+37
    %v775 = vand.u32 %v734, 2147483648
    %v776 = vor.u32 1.1754944e-38, %v775
    %v777 = vsel %vm774, %v776, %v772
    %v778 = vmul.f32 %v762, %v777
    %779 = vrot.lane.b32.xlu0 %v582, 112
    %v780 = vpop.permute.xlu0 %779
    %781 = vrot.lane.b32.xlu0 %v607, 112
    %v782 = vpop.permute.xlu0 %781
    %783 = vrot.lane.b32.xlu0 %v610, 112
    %v784 = vpop.permute.xlu0 %783
    %v785 = vsel %vm172, %v780, 0
    %v787 = vsel %vm172, %v782, 0
    %v789 = vsel %vm172, %v784, 0
    %791 = vmatpush.xpose.msra.mxu0 0.0
    %792 = vmatpush.xpose.msra.mxu0 0.0
    %793 = vmatpush.xpose.msra.mxu0 0.0
    %794 = vmatpush.xpose.msra.mxu0 0.0
    %795 = vmatpush.xpose.msra.mxu0 0.0
    %796 = vmatpush.xpose.msra.mxu0 0.0
    %797 = vmatpush.xpose.msra.mxu0 0.0
    %798 = vmatpush.xpose.msra.mxu0 0.0
    %799 = vmatpush.xpose.msra.mxu0 0.0
    %800 = vmatpush.xpose.msra.mxu0 0.0
    %801 = vmatpush.xpose.msra.mxu0 0.0
    %802 = vmatpush.xpose.msra.mxu0 0.0
    %803 = vmatpush.xpose.msra.mxu0 0.0
    %804 = vmatpush.xpose.msra.mxu0 0.0
    %805 = vmatpush.xpose.msra.mxu0 %v789
    %806 = vmatpush.xpose.msra.mxu0 %v787
    %807 = vmatmul.f32.gmra.mxu0 %v785
    %v808 = vpop.f32.mrf.mxu0
    %v809 = vadd.f32 0.0, %v808
    %810 = vdwg.mxu0
    %v811 = vsel %vm202, %v809, -inf
    %812 = vmax.xlane.f32.xlu0 %v811
    %v813 = vpop.xlane.xlu0 %812
    %v814 = vsub.f32 %v809, %v813
    %v815 = vmul.f32 %v814, 1.442695
    %v816 = vpow.pop %v815
    %v817 = vsel %vm202, %v816, 0.0
    %818 = vadd.xlane.f32.xlu0 %v817
    %v819 = vpop.xlane.xlu0 %818
    %820 = vrot.lane.b32.xlu0 %v607, 80
    %v821 = vpop.permute.xlu0 %820
    %822 = vrot.lane.b32.xlu0 %v610, 80
    %v823 = vpop.permute.xlu0 %822
    %v827 = vsel %vm202, %v816, 0
    %829 = vmatpush.msra.mxu0 0.0
    %830 = vmatpush.msra.mxu0 0.0
    %831 = vmatpush.msra.mxu0 0.0
    %832 = vmatpush.msra.mxu0 0.0
    %833 = vmatpush.msra.mxu0 0.0
    %834 = vmatpush.msra.mxu0 0.0
    %835 = vmatpush.msra.mxu0 0.0
    %836 = vmatpush.msra.mxu0 0.0
    %837 = vmatpush.msra.mxu0 0.0
    %838 = vmatpush.msra.mxu0 0.0
    %839 = vmatpush.msra.mxu0 0.0
    %840 = vmatpush.msra.mxu0 0.0
    %841 = vmatpush.msra.mxu0 0.0
    %842 = vmatpush.msra.mxu0 0.0
    %843 = vmatpush.msra.mxu0 %v823
    %844 = vmatpush.msra.mxu0 %v821
    %845 = vmatmul.f32.gmra.mxu0 %v827
    %v846 = vpop.f32.mrf.mxu0
    %v847 = vadd.f32 0.0, %v846
    %848 = vdwg.mxu0
    %v849 = vrcp.pop %v819
    %v850 = vmul.f32 %v819, %v849
    %v851 = vsub.f32 1.0, %v850
    %v852 = vmul.f32 %v849, %v851
    %v853 = vadd.f32 %v849, %v852
    %vm854 = vweird.f32 %v819
    %vm855 = vweird.f32 %v849
    %vm856 = vmor %vm854, %vm855
    %v857 = vsel %vm856, %v849, %v853
    %v858 = vand.u32 2147483647, %v819
    %vm859 = vcmp.eq.f32.partialorder %v858, 8.507059e+37
    %v860 = vand.u32 %v819, 2147483648
    %v861 = vor.u32 1.1754944e-38, %v860
    %v862 = vsel %vm859, %v861, %v857
    %v863 = vmul.f32 %v847, %v862
    %864 = vrot.lane.b32.xlu0 %v582, 104
    %v865 = vpop.permute.xlu0 %864
    %866 = vrot.lane.b32.xlu0 %v607, 104
    %v867 = vpop.permute.xlu0 %866
    %868 = vrot.lane.b32.xlu0 %v610, 104
    %v869 = vpop.permute.xlu0 %868
    %v870 = vsel %vm172, %v865, 0
    %v872 = vsel %vm172, %v867, 0
    %v874 = vsel %vm172, %v869, 0
    %876 = vmatpush.xpose.msra.mxu0 0.0
    %877 = vmatpush.xpose.msra.mxu0 0.0
    %878 = vmatpush.xpose.msra.mxu0 0.0
    %879 = vmatpush.xpose.msra.mxu0 0.0
    %880 = vmatpush.xpose.msra.mxu0 0.0
    %881 = vmatpush.xpose.msra.mxu0 0.0
    %882 = vmatpush.xpose.msra.mxu0 0.0
    %883 = vmatpush.xpose.msra.mxu0 0.0
    %884 = vmatpush.xpose.msra.mxu0 0.0
    %885 = vmatpush.xpose.msra.mxu0 0.0
    %886 = vmatpush.xpose.msra.mxu0 0.0
    %887 = vmatpush.xpose.msra.mxu0 0.0
    %888 = vmatpush.xpose.msra.mxu0 0.0
    %889 = vmatpush.xpose.msra.mxu0 0.0
    %890 = vmatpush.xpose.msra.mxu0 %v874
    %891 = vmatpush.xpose.msra.mxu0 %v872
    %892 = vmatmul.f32.gmra.mxu0 %v870
    %v893 = vpop.f32.mrf.mxu0
    %v894 = vadd.f32 0.0, %v893
    %895 = vdwg.mxu0
    %v896 = vsel %vm202, %v894, -inf
    %897 = vmax.xlane.f32.xlu0 %v896
    %v898 = vpop.xlane.xlu0 %897
    %v899 = vsub.f32 %v894, %v898
    %v900 = vmul.f32 %v899, 1.442695
    %v901 = vpow.pop %v900
    %v902 = vsel %vm202, %v901, 0.0
    %903 = vadd.xlane.f32.xlu0 %v902
    %v904 = vpop.xlane.xlu0 %903
    %905 = vrot.lane.b32.xlu0 %v607, 72
    %v906 = vpop.permute.xlu0 %905
    %907 = vrot.lane.b32.xlu0 %v610, 72
    %v908 = vpop.permute.xlu0 %907
    %v912 = vsel %vm202, %v901, 0
    %914 = vmatpush.msra.mxu0 0.0
    %915 = vmatpush.msra.mxu0 0.0
    %916 = vmatpush.msra.mxu0 0.0
    %917 = vmatpush.msra.mxu0 0.0
    %918 = vmatpush.msra.mxu0 0.0
    %919 = vmatpush.msra.mxu0 0.0
    %920 = vmatpush.msra.mxu0 0.0
    %921 = vmatpush.msra.mxu0 0.0
    %922 = vmatpush.msra.mxu0 0.0
    %923 = vmatpush.msra.mxu0 0.0
    %924 = vmatpush.msra.mxu0 0.0
    %925 = vmatpush.msra.mxu0 0.0
    %926 = vmatpush.msra.mxu0 0.0
    %927 = vmatpush.msra.mxu0 0.0
    %928 = vmatpush.msra.mxu0 %v908
    %929 = vmatpush.msra.mxu0 %v906
    %930 = vmatmul.f32.gmra.mxu0 %v912
    %v931 = vpop.f32.mrf.mxu0
    %v932 = vadd.f32 0.0, %v931
    %933 = vdwg.mxu0
    %v934 = vrcp.pop %v904
    %v935 = vmul.f32 %v904, %v934
    %v936 = vsub.f32 1.0, %v935
    %v937 = vmul.f32 %v934, %v936
    %v938 = vadd.f32 %v934, %v937
    %vm939 = vweird.f32 %v904
    %vm940 = vweird.f32 %v934
    %vm941 = vmor %vm939, %vm940
    %v942 = vsel %vm941, %v934, %v938
    %v943 = vand.u32 2147483647, %v904
    %vm944 = vcmp.eq.f32.partialorder %v943, 8.507059e+37
    %v945 = vand.u32 %v904, 2147483648
    %v946 = vor.u32 1.1754944e-38, %v945
    %v947 = vsel %vm944, %v946, %v942
    %v948 = vmul.f32 %v932, %v947
    %950 = vrot.lane.b32.xlu0 %v778, 8
    %v951 = vpop.permute.xlu0 %950
    %954 = vrot.lane.b32.xlu0 %v863, 16
    %v955 = vpop.permute.xlu0 %954
    %958 = vrot.lane.b32.xlu0 %v948, 24
    %v959 = vpop.permute.xlu0 %958
    %v961 = vsel %vm172, %v693, %v951
    %v962 = vsel %vm202, %v961, %v955
    %v963 = vsel %vm525, %v962, %v959
    %v965 = vsel %vm118, %v963, 0
    %967 = vmatpush.msra.mxu0 0.0
    %968 = vmatpush.msra.mxu0 0.0
    %969 = vmatpush.msra.mxu0 0.0
    %970 = vmatpush.msra.mxu0 0.0
    %971 = vmatpush.msra.mxu0 0.0
    %972 = vmatpush.msra.mxu0 0.0
    %973 = vmatpush.msra.mxu0 0.0
    %974 = vmatpush.msra.mxu0 0.0
    %975 = vmatpush.msra.mxu0 0.0
    %976 = vmatpush.msra.mxu0 0.0
    %977 = vmatpush.msra.mxu0 0.0
    %978 = vmatpush.msra.mxu0 0.0
    %979 = vmatpush.msra.mxu0 %v113
    %980 = vmatpush.msra.mxu0 %v112
    %981 = vmatpush.msra.mxu0 %v111
    %982 = vmatpush.msra.mxu0 %v110
    %983 = vmatmul.f32.gmra.mxu0 %v965
    %v984 = vpop.f32.mrf.mxu0
    %v985 = vadd.f32 %v528, %v984
    %986 = vdwg.mxu0
    %s987 = scalar_lea.vmem [#allocation11], 8
    %988 = vst.msk [vmem:[%s987] sm:$0xff] %vm118, %v985
    // Predicated region
    $region46: #{tpu_custom_call.1} parent=1 // pred_check
      _
    $region47: #{tpu_custom_call.1} parent=1 // pred_check_branch
      %990 = sbr.rel (0) target = $region49
    $region48: #{tpu_custom_call.1} parent=1 // pred_region
      %992 = vsyncadd [#allocation4], 0
      %s993 = sshll.u32 [#allocation11], 4
      %s994 = int_to_ptr.vmem [resolvable:$true] %s993
      %s995 = sshll.u32 %s6, 4
      %s996 = int_to_ptr.hbm [resolvable:$true] %s995
      %1001 = dma.vmem_to_hbm [thread:$0]  %s994, 256, %s996, [#allocation4], 128, 128, 8
    $region49: #{tpu_custom_call.1} parent=1 // pred_fallthru
      _
    // Predicated region
    $region50: #{tpu_custom_call.1} parent=1 // pred_check
      _
    $region51: #{tpu_custom_call.1} parent=1 // pred_check_branch
      %1003 = sbr.rel (0) target = $region53
    $region52: #{tpu_custom_call.1} parent=1 // pred_region
      %1005 = dma.done [#allocation4], 256
    $region53: #{tpu_custom_call.1} parent=1 // pred_fallthru
      _
    %1006 = vsyncpa [#allocation3], 1
    %1007 = vsyncpa [#allocation6], 1
    %1008 = vsyncpa [#allocation9], 1
    %1009 = vsyncpa [#allocation4], 1

</llo_original>
